<compile_context>
chip_gen: v5e
topology: v5e:2x2
jax: 0.10.0
libtpu: 0.0.40
codegen_flags: <defaults>
</compile_context>

<pallas_src>
import functools

import jax
import jax.numpy as jnp
from jax import lax
from jax.experimental import pallas as pl
from jax.experimental.pallas import tpu as pltpu


def _bt_corr_kernel(za_ref, zb_ref, out_ref, *, inv_n, tile_d, d_valid):
    """Per-i-row partial sums of the Barlow-Twins reductions.

    out_ref view is (1, 8, 128) f32; lane 0 of sublanes 0..3 carries:
      sublane 0: sum over finite tiles of sum(c^2)            (c unscaled by 1/n)
      sublane 1: sum over diagonal tiles of sum(diag(c)^2)    (valid features)
      sublane 2: sum over diagonal tiles of sum((diag(c)*inv_n - 1)^2)
      sublane 3: count of non-finite tiles (NaN/Inf anywhere in the tile)
    """
    i = pl.program_id(0)
    j = pl.program_id(1)

    @pl.when(j == 0)
    def _init():
        out_ref[...] = jnp.zeros_like(out_ref)

    # (td, td) cross-correlation tile on the MXU, f32 accumulation.
    c = lax.dot_general(
        za_ref[...], zb_ref[...],
        dimension_numbers=(((0,), (0,)), ((), ())),
        preferred_element_type=jnp.float32)

    s2 = jnp.sum(c * c)                  # finite <=> every entry of c is finite
    finite = jnp.isfinite(s2)
    off_sq = jnp.where(finite, s2, jnp.float32(0.0))
    nonfin = jnp.where(finite, jnp.float32(0.0), jnp.float32(1.0))

    row_sel = lax.broadcasted_iota(jnp.int32, (1, 8, 128), 1)
    contrib = (jnp.where(row_sel == 0, off_sq, 0.0)
               + jnp.where(row_sel == 3, nonfin, 0.0))
    out_ref[...] = out_ref[...] + contrib

    # Diagonal tiles only: take diag straight from the c tile already in
    # registers (same MXU values cancel exactly in the off-diagonal sum).
    @pl.when(jnp.logical_and(i == j, finite))
    def _diag():
        row = lax.broadcasted_iota(jnp.int32, c.shape, 0)
        col = lax.broadcasted_iota(jnp.int32, c.shape, 1)
        valid = (j * tile_d + col) < d_valid      # exclude zero-padded features
        is_diag = jnp.logical_and(row == col, valid)
        diag_sq = jnp.sum(jnp.where(is_diag, c * c, 0.0))
        dterm = c * inv_n - 1.0
        inv_sum = jnp.sum(jnp.where(is_diag, dterm * dterm, 0.0))
        contrib_d = (jnp.where(row_sel == 1, diag_sq, 0.0)
                     + jnp.where(row_sel == 2, inv_sum, 0.0))
        out_ref[...] = out_ref[...] + contrib_d


def barlow_twins_loss(z_a, z_b, lamb, *, tile_d=None, mxu_bf16=True):
    """Returns (loss, invariance_loss, redundancy_reduction_loss) as f32 scalars."""
    assert z_a.shape == z_b.shape and z_a.ndim == 2
    n, d = z_a.shape
    eps = 1e-5
    limit = 1e30 if z_a.dtype == jnp.float32 else 10000.0
    inv_n = 1.0 / float(n)

    # ---- prepass (plain JAX, O(N*D) once): combined-2N BN stats + normalize --
    za = z_a.astype(jnp.float32)
    zb = z_b.astype(jnp.float32)
    inv_two_n = 1.0 / (2.0 * n)
    mean = (jnp.sum(za, axis=0, keepdims=True)
            + jnp.sum(zb, axis=0, keepdims=True)) * inv_two_n
    da = za - mean
    db = zb - mean
    var = (jnp.sum(da * da, axis=0, keepdims=True)
           + jnp.sum(db * db, axis=0, keepdims=True)) * inv_two_n
    rstd = lax.rsqrt(var + eps)
    za_n = da * rstd
    zb_n = db * rstd

    # MXU operands: bf16 by default (native MXU path, half the slab DMA bytes).
    mm_dtype = jnp.bfloat16 if mxu_bf16 else jnp.float32
    za_mm = za_n.astype(mm_dtype)
    zb_mm = zb_n.astype(mm_dtype)

    # Pad D to a multiple of 128 (lane-dense layout). Padded normalized columns
    # are zero -> contribute 0 to c; masked out of the invariance sum in-kernel.
    d_pad = ((d + 127) // 128) * 128
    if d_pad != d:
        pad = ((0, 0), (0, d_pad - d))
        za_mm = jnp.pad(za_mm, pad)
        zb_mm = jnp.pad(zb_mm, pad)

    # ---- tile size & VMEM budget from hardware info --------------------------
    try:
        vmem_cap = int(getattr(pltpu.get_tpu_info(), "vmem_capacity_bytes",
                               64 * 2**20))
    except Exception:
        vmem_cap = 64 * 2**20
    headroom = 16 * 2**20
    budget = max(8 * 2**20, vmem_cap - headroom)
    item = jnp.dtype(mm_dtype).itemsize

    def _vmem_need(td):
        slabs = 2 * 2 * n * td * item          # 2 inputs x double buffer
        ctile = 4 * td * td * 4                # c tile + elementwise temporaries
        return slabs + ctile + 2 * 8 * 128 * 4

    if tile_d is None:
        tile_d = 128
        for cand in (512, 256):
            if d_pad % cand == 0 and _vmem_need(cand) <= budget:
                tile_d = cand
                break
    assert d_pad % tile_d == 0
    nt = d_pad // tile_d
    # TODO(synk): add an N-streaming grid axis so slab VMEM is bounded for huge N.

    vmem_limit = int(min(max(32 * 2**20, _vmem_need(tile_d) + headroom),
                         max(16 * 2**20, vmem_cap - 8 * 2**20)))

    kernel = functools.partial(
        _bt_corr_kernel, inv_n=inv_n, tile_d=int(tile_d), d_valid=int(d))

    slab_a = pl.BlockSpec((n, tile_d), lambda i, j: (0, i))
    # TODO(synk): pipeline_mode=pl.Buffered(3) on slab_b if profiling shows
    #             exposed DMA on v6e after this restructure.
    slab_b = pl.BlockSpec((n, tile_d), lambda i, j: (0, j))
    out_spec = pl.BlockSpec((1, 8, 128), lambda i, j: (i, 0, 0))

    grid_spec = pltpu.PrefetchScalarGridSpec(
        num_scalar_prefetch=0,
        grid=(nt, nt),
        in_specs=[slab_a, slab_b],
        out_specs=out_spec,
    )

    partials = pl.pallas_call(
        kernel,
        out_shape=jax.ShapeDtypeStruct((nt, 8, 128), jnp.float32),
        grid_spec=grid_spec,
        compiler_params=pltpu.CompilerParams(
            # Output blocks are per-i -> i is independent (megacore / 2nd TC on
            # v7x); j accumulates into the resident output block -> arbitrary.
            dimension_semantics=("parallel", "arbitrary"),
            vmem_limit_bytes=vmem_limit),
    )(za_mm, zb_mm)

    p = partials[:, :4, 0]                     # (nt, 4) per-row partial sums
    off_sq = jnp.sum(p[:, 0])
    diag_sq = jnp.sum(p[:, 1])
    inv_fast = jnp.sum(p[:, 2])
    nonfinite = jnp.sum(p[:, 3])

    lamb_f = jnp.float32(lamb)

    def _fast(_):
        red = (off_sq - diag_sq) * jnp.float32(inv_n * inv_n)
        return inv_fast + lamb_f * red, inv_fast, red

    def _slow(_):
        # Cold fallback (only executed if some c tile was non-finite): exact
        # NaN / +-Inf repair semantics of the reference in pure JAX.
        c = jnp.dot(za_n.T, zb_n, precision=lax.Precision.HIGHEST)
        c = jnp.where(jnp.isnan(c), 0.0, c)
        fin = jnp.isfinite(c)
        any_fin = jnp.any(fin)
        max_v = jnp.where(any_fin, jnp.max(jnp.where(fin, c, -jnp.inf)),
                          jnp.float32(limit))
        min_v = jnp.where(any_fin, jnp.min(jnp.where(fin, c, jnp.inf)),
                          jnp.float32(-limit))
        pos_repl = jnp.where(max_v != 0.0, max_v, jnp.float32(limit))
        neg_repl = jnp.where(min_v != 0.0, min_v, jnp.float32(-limit))
        c = jnp.where(c == jnp.inf, pos_repl, c)
        c = jnp.where(c == -jnp.inf, neg_repl, c)
        c = c * jnp.float32(inv_n)
        diag = jnp.diagonal(c)
        inv_loss = jnp.sum((diag - 1.0) ** 2)
        red = jnp.sum(c * c) - jnp.sum(diag * diag)
        return inv_loss + lamb_f * red, inv_loss, red

    return lax.cond(nonfinite > 0.0, _slow, _fast, None)


def _reference(z_a, z_b, lamb, eps=1e-5):
    """Pure-JAX reference (finite-input path) mirroring the PyTorch module."""
    n = z_a.shape[0]
    z = jnp.concatenate([z_a, z_b], axis=0).astype(jnp.float32)
    mean = jnp.mean(z, axis=0, keepdims=True)
    var = jnp.mean((z - mean) ** 2, axis=0, keepdims=True)
    zn = (z - mean) * lax.rsqrt(var + eps)
    c = jnp.dot(zn[:n].T, zn[n:], precision=lax.Precision.HIGHEST) / n
    diag = jnp.diagonal(c)
    inv = jnp.sum((diag - 1.0) ** 2)
    red = jnp.sum(c * c) - jnp.sum(diag * diag)
    return inv + lamb * red, inv, red


if __name__ == "__main__":
    key = jax.random.PRNGKey(0)
    k_a, k_b = jax.random.split(key)
    N, D = 8, 32                       # small demo: batch=8, embedding dim=32
    z_a = jax.random.normal(k_a, (N, D), dtype=jnp.float32)
    z_b = jax.random.normal(k_b, (N, D), dtype=jnp.float32)
    lamb = 0.005

    out_bf16 = barlow_twins_loss(z_a, z_b, lamb)                     # default path
    out_f32 = barlow_twins_loss(z_a, z_b, lamb, mxu_bf16=False)      # exact-ish path
    jax.block_until_ready((out_bf16, out_f32))

    ref = _reference(z_a, z_b, lamb)
    for got, want in zip(out_f32, ref):
        assert jnp.allclose(got, want, rtol=1e-2, atol=1e-3), (got, want)
    for got, want in zip(out_bf16, ref):
        assert jnp.allclose(got, want, rtol=3e-2, atol=3e-2), (got, want)

    print("KERNEL_OK")
</pallas_src>

<mosaic_0001>
module attributes {stable_mosaic.version = 11 : i64} {
  func.func @_bt_corr_kernel(%arg0: i32, %arg1: i32, %arg2: memref<8x128xbf16, #tpu.memory_space<vmem>>, %arg3: memref<8x128xbf16, #tpu.memory_space<vmem>>, %arg4: memref<1x8x128xf32, #tpu.memory_space<vmem>>) attributes {dimension_semantics = [#tpu.dimension_semantics<parallel>, #tpu.dimension_semantics<arbitrary>], iteration_bounds = array<i64: 1, 1>, scalar_prefetch = 0 : i64, scratch_operands = 0 : i64, tpu.core_type = #tpu.core_type<tc>, window_params = [{transform_indices = @transform_0, window_bounds = array<i64: 8, 128>}, {transform_indices = @transform_1, window_bounds = array<i64: 8, 128>}, {transform_indices = @transform_2, window_bounds = array<i64: 1, 8, 128>}]} {
    %c0_i32 = arith.constant 0 : i32
    %0 = arith.cmpi eq, %arg1, %c0_i32 : i32
    %1 = arith.extui %0 : i1 to i32
    %c0_i32_0 = arith.constant 0 : i32
    %2 = arith.cmpi ne, %1, %c0_i32_0 : i32
    scf.if %2 {
      %cst_18 = arith.constant 0.000000e+00 : f32
      %34 = vector.broadcast %cst_18 : f32 to vector<1x8x128xf32>
      %c0_19 = arith.constant 0 : index
      %c0_20 = arith.constant 0 : index
      %c0_21 = arith.constant 0 : index
      %35 = vector.load %arg4[%c0_19, %c0_20, %c0_21] : memref<1x8x128xf32, #tpu.memory_space<vmem>>, vector<1x8x128xf32>
      tpu.vector_store %arg4[%c0_19, %c0_20, %c0_21], %34 {strides = array<i32>} : memref<1x8x128xf32, #tpu.memory_space<vmem>>, vector<1x8x128xf32>,
    } else {
    }
    %c0 = arith.constant 0 : index
    %c0_1 = arith.constant 0 : index
    %3 = vector.load %arg2[%c0, %c0_1] : memref<8x128xbf16, #tpu.memory_space<vmem>>, vector<8x128xbf16>
    %c0_2 = arith.constant 0 : index
    %c0_3 = arith.constant 0 : index
    %4 = vector.load %arg3[%c0_2, %c0_3] : memref<8x128xbf16, #tpu.memory_space<vmem>>, vector<8x128xbf16>
    %cst = arith.constant dense<0.000000e+00> : vector<128x128xf32>
    %5 = tpu.matmul %3, %4, %cst {dimension_numbers = #tpu.dot_dimension_numbers<[0], [0], [1], [1], [0, 1, 1, 1], [], []>} : vector<8x128xbf16>, vector<8x128xbf16>, vector<128x128xf32> -> vector<128x128xf32>
    %6 = arith.mulf %5, %5 : vector<128x128xf32>
    %7 = vector.shape_cast %6 : vector<128x128xf32> to vector<1x128x128xf32>
    %cst_4 = arith.constant dense<0.000000e+00> : vector<1xf32>
    %8 = vector.multi_reduction <add>, %7, %cst_4 [1, 2] : vector<1x128x128xf32> to vector<1xf32>
    %9 = vector.shape_cast %8 : vector<1xf32> to vector<1x1x1xf32>
    %10 = vector.extract %9[0, 0, 0] : f32 from vector<1x1x1xf32>
    %11 = tpu.weird %10 : f32 -> i1
    %true = arith.constant true
    %12 = arith.xori %11, %true : i1
    %cst_5 = arith.constant 0.000000e+00 : f32
    %13 = arith.select %12, %10, %cst_5 : f32
    %cst_6 = arith.constant 0.000000e+00 : f32
    %cst_7 = arith.constant 1.000000e+00 : f32
    %14 = arith.select %12, %cst_6, %cst_7 : f32
    %15 = tpu.iota {dimensions = array<i32: 1>} : vector<1x8x128xi32>
    %c0_i32_8 = arith.constant 0 : i32
    %16 = vector.broadcast %c0_i32_8 : i32 to vector<1x8x128xi32>
    %17 = arith.cmpi eq, %15, %16 : vector<1x8x128xi32>
    %cst_9 = arith.constant 0.000000e+00 : f32
    %18 = vector.broadcast %13 : f32 to vector<1x8x128xf32>
    %19 = vector.broadcast %cst_9 : f32 to vector<1x8x128xf32>
    %20 = arith.select %17, %18, %19 : vector<1x8x128xi1>, vector<1x8x128xf32>
    %c3_i32 = arith.constant 3 : i32
    %21 = vector.broadcast %c3_i32 : i32 to vector<1x8x128xi32>
    %22 = arith.cmpi eq, %15, %21 : vector<1x8x128xi32>
    %cst_10 = arith.constant 0.000000e+00 : f32
    %23 = vector.broadcast %14 : f32 to vector<1x8x128xf32>
    %24 = vector.broadcast %cst_10 : f32 to vector<1x8x128xf32>
    %25 = arith.select %22, %23, %24 : vector<1x8x128xi1>, vector<1x8x128xf32>
    %26 = arith.addf %20, %25 : vector<1x8x128xf32>
    %c0_11 = arith.constant 0 : index
    %c0_12 = arith.constant 0 : index
    %c0_13 = arith.constant 0 : index
    %27 = vector.load %arg4[%c0_11, %c0_12, %c0_13] : memref<1x8x128xf32, #tpu.memory_space<vmem>>, vector<1x8x128xf32>
    %28 = arith.addf %27, %26 : vector<1x8x128xf32>
    %c0_14 = arith.constant 0 : index
    %c0_15 = arith.constant 0 : index
    %c0_16 = arith.constant 0 : index
    %29 = vector.load %arg4[%c0_14, %c0_15, %c0_16] : memref<1x8x128xf32, #tpu.memory_space<vmem>>, vector<1x8x128xf32>
    tpu.vector_store %arg4[%c0_14, %c0_15, %c0_16], %28 {strides = array<i32>} : memref<1x8x128xf32, #tpu.memory_space<vmem>>, vector<1x8x128xf32>,
    %30 = arith.cmpi eq, %arg0, %arg1 : i32
    %31 = arith.andi %30, %12 : i1
    %32 = arith.extui %31 : i1 to i32
    %c0_i32_17 = arith.constant 0 : i32
    %33 = arith.cmpi ne, %32, %c0_i32_17 : i32
    scf.if %33 {
      %34 = tpu.iota {dimensions = array<i32: 0>} : vector<128x128xi32>
      %35 = tpu.iota {dimensions = array<i32: 1>} : vector<128x128xi32>
      %c128_i32 = arith.constant 128 : i32
      %36 = arith.muli %arg1, %c128_i32 : i32
      %37 = vector.broadcast %36 : i32 to vector<128x128xi32>
      %38 = arith.addi %37, %35 : vector<128x128xi32>
      %c32_i32 = arith.constant 32 : i32
      %39 = vector.broadcast %c32_i32 : i32 to vector<128x128xi32>
      %40 = arith.cmpi slt, %38, %39 : vector<128x128xi32>
      %41 = arith.cmpi eq, %34, %35 : vector<128x128xi32>
      %42 = arith.andi %41, %40 : vector<128x128xi1>
      %43 = arith.mulf %5, %5 : vector<128x128xf32>
      %cst_18 = arith.constant 0.000000e+00 : f32
      %44 = vector.broadcast %cst_18 : f32 to vector<128x128xf32>
      %45 = arith.select %42, %43, %44 : vector<128x128xi1>, vector<128x128xf32>
      %46 = vector.shape_cast %45 : vector<128x128xf32> to vector<1x128x128xf32>
      %cst_19 = arith.constant dense<0.000000e+00> : vector<1xf32>
      %47 = vector.multi_reduction <add>, %46, %cst_19 [1, 2] : vector<1x128x128xf32> to vector<1xf32>
      %48 = vector.shape_cast %47 : vector<1xf32> to vector<1x1x1xf32>
      %49 = vector.extract %48[0, 0, 0] : f32 from vector<1x1x1xf32>
      %cst_20 = arith.constant 1.250000e-01 : f32
      %50 = vector.broadcast %cst_20 : f32 to vector<128x128xf32>
      %51 = arith.mulf %5, %50 : vector<128x128xf32>
      %cst_21 = arith.constant 1.000000e+00 : f32
      %52 = vector.broadcast %cst_21 : f32 to vector<128x128xf32>
      %53 = arith.subf %51, %52 : vector<128x128xf32>
      %54 = arith.mulf %53, %53 : vector<128x128xf32>
      %cst_22 = arith.constant 0.000000e+00 : f32
      %55 = vector.broadcast %cst_22 : f32 to vector<128x128xf32>
      %56 = arith.select %42, %54, %55 : vector<128x128xi1>, vector<128x128xf32>
      %57 = vector.shape_cast %56 : vector<128x128xf32> to vector<1x128x128xf32>
      %cst_23 = arith.constant dense<0.000000e+00> : vector<1xf32>
      %58 = vector.multi_reduction <add>, %57, %cst_23 [1, 2] : vector<1x128x128xf32> to vector<1xf32>
      %59 = vector.shape_cast %58 : vector<1xf32> to vector<1x1x1xf32>
      %60 = vector.extract %59[0, 0, 0] : f32 from vector<1x1x1xf32>
      %c1_i32 = arith.constant 1 : i32
      %61 = vector.broadcast %c1_i32 : i32 to vector<1x8x128xi32>
      %62 = arith.cmpi eq, %15, %61 : vector<1x8x128xi32>
      %cst_24 = arith.constant 0.000000e+00 : f32
      %63 = vector.broadcast %49 : f32 to vector<1x8x128xf32>
      %64 = vector.broadcast %cst_24 : f32 to vector<1x8x128xf32>
      %65 = arith.select %62, %63, %64 : vector<1x8x128xi1>, vector<1x8x128xf32>
      %c2_i32 = arith.constant 2 : i32
      %66 = vector.broadcast %c2_i32 : i32 to vector<1x8x128xi32>
      %67 = arith.cmpi eq, %15, %66 : vector<1x8x128xi32>
      %cst_25 = arith.constant 0.000000e+00 : f32
      %68 = vector.broadcast %60 : f32 to vector<1x8x128xf32>
      %69 = vector.broadcast %cst_25 : f32 to vector<1x8x128xf32>
      %70 = arith.select %67, %68, %69 : vector<1x8x128xi1>, vector<1x8x128xf32>
      %71 = arith.addf %65, %70 : vector<1x8x128xf32>
      %c0_26 = arith.constant 0 : index
      %c0_27 = arith.constant 0 : index
      %c0_28 = arith.constant 0 : index
      %72 = vector.load %arg4[%c0_26, %c0_27, %c0_28] : memref<1x8x128xf32, #tpu.memory_space<vmem>>, vector<1x8x128xf32>
      %73 = arith.addf %72, %71 : vector<1x8x128xf32>
      %c0_29 = arith.constant 0 : index
      %c0_30 = arith.constant 0 : index
      %c0_31 = arith.constant 0 : index
      %74 = vector.load %arg4[%c0_29, %c0_30, %c0_31] : memref<1x8x128xf32, #tpu.memory_space<vmem>>, vector<1x8x128xf32>
      tpu.vector_store %arg4[%c0_29, %c0_30, %c0_31], %73 {strides = array<i32>} : memref<1x8x128xf32, #tpu.memory_space<vmem>>, vector<1x8x128xf32>,
    } else {
    }
    return
  }
  func.func @transform_0(%arg0: i32, %arg1: i32) -> (i32, i32) {
    %c0_i32 = arith.constant 0 : i32
    %c0_i32_0 = arith.constant 0 : i32
    return %c0_i32, %arg0 : i32, i32
  }
  func.func @transform_1(%arg0: i32, %arg1: i32) -> (i32, i32) {
    %c0_i32 = arith.constant 0 : i32
    %c0_i32_0 = arith.constant 0 : i32
    return %c0_i32, %arg1 : i32, i32
  }
  func.func @transform_2(%arg0: i32, %arg1: i32) -> (i32, i32, i32) {
    %c0_i32 = arith.constant 0 : i32
    %c0_i32_0 = arith.constant 0 : i32
    %c0_i32_1 = arith.constant 0 : i32
    return %arg0, %c0_i32, %c0_i32_0 : i32, i32, i32
  }
}

</mosaic_0001>

<llo_original>
// kernel: tpu_custom_call.1
$region0: #{tpu_custom_call.1}
  #allocation0 [shape = 'u32[]', space=smem, size = 0x4, offset = 0x4, fixed_abs, tag = 'smem constant byte address 0x4 - core index']
  #allocation1 [shape = 'u32[72,128]{1,0:T(1,128)}', space=vmem, size = 0x9000, scoped, tag = 'internal scratch']
  %s0 = inlined_call_operand.hbm [shape: bf16[8,128], index: 0, kind: input, shape index: {}]
  %s1 = inlined_call_operand.hbm [shape: bf16[8,128], index: 1, kind: input, shape index: {}]
  %s2 = inlined_call_operand.hbm [shape: f32[1,8,128], index: 2, kind: output, shape index: {}]
  %s3 = sld [smem:[#allocation0]]
  $region34: #{tpu_custom_call.1} parent=0
    _
  %s5 = ssub.s32 1, %s3
  %s6 = scalar_select 0, %s5, %s3
  $region1: #{tpu_custom_call.1} parent=0
    #allocation2 [shape = 'u8[2048]{0}', space=vmem, size = 0x800, scoped, tag = 'input window, operand 0, single buffered']
    #allocation3 [shape = 's32[1]{0}', space=sflag, size = 0x4, scoped, tag = 'scoped memory for tpu_custom_call.1']
    #allocation4 [shape = 's32[1]{0}', space=sflag, size = 0x4, scoped, tag = 'scoped memory for tpu_custom_call.1']
    #allocation5 [shape = 'u8[2048]{0}', space=vmem, size = 0x800, scoped, tag = 'input window, operand 1, single buffered']
    #allocation6 [shape = 's32[1]{0}', space=sflag, size = 0x4, scoped, tag = 'scoped memory for tpu_custom_call.1']
    #allocation7 [shape = 'u8[4096]{0}', space=vmem, size = 0x1000, scoped, tag = 'output window, operand 0, single buffered']
    %7 = vsyncpa [#allocation3], 0
    %8 = vsyncpa [#allocation6], 0
    %9 = vsyncpa [#allocation4], 0
    // Predicated region
    $region2: #{tpu_custom_call.1} parent=1 // pred_check
      _
    $region3: #{tpu_custom_call.1} parent=1 // pred_check_branch
      %11 = sbr.rel (0) target = $region5
    $region4: #{tpu_custom_call.1} parent=1 // pred_region
      %13 = vsyncadd [#allocation3], 0
      %s15 = sshll.u32 %s0, 4
      %s16 = int_to_ptr.hbm [resolvable:$true] %s15
      %s17 = sshll.u32 [#allocation2], 4
      %s18 = int_to_ptr.vmem [resolvable:$true] %s17
      %20 = dma.hbm_to_vmem [thread:$0]  %s16, 64, %s18, [#allocation3]
    $region5: #{tpu_custom_call.1} parent=1 // pred_fallthru
      _
    // Predicated region
    $region6: #{tpu_custom_call.1} parent=1 // pred_check
      _
    $region7: #{tpu_custom_call.1} parent=1 // pred_check_branch
      %22 = sbr.rel (0) target = $region9
    $region8: #{tpu_custom_call.1} parent=1 // pred_region
      %24 = vsyncadd [#allocation6], 0
      %s26 = sshll.u32 %s1, 4
      %s27 = int_to_ptr.hbm [resolvable:$true] %s26
      %s28 = sshll.u32 [#allocation5], 4
      %s29 = int_to_ptr.vmem [resolvable:$true] %s28
      %31 = dma.hbm_to_vmem [thread:$0]  %s27, 64, %s29, [#allocation6]
    $region9: #{tpu_custom_call.1} parent=1 // pred_fallthru
      _
    // Predicated region
    $region10: #{tpu_custom_call.1} parent=1 // pred_check
      _
    $region11: #{tpu_custom_call.1} parent=1 // pred_check_branch
      %33 = sbr.rel (0) target = $region13
    $region12: #{tpu_custom_call.1} parent=1 // pred_region
      %35 = dma.done [#allocation3], 64
    $region13: #{tpu_custom_call.1} parent=1 // pred_fallthru
      _
    // Predicated region
    $region14: #{tpu_custom_call.1} parent=1 // pred_check
      _
    $region15: #{tpu_custom_call.1} parent=1 // pred_check_branch
      %37 = sbr.rel (0) target = $region17
    $region16: #{tpu_custom_call.1} parent=1 // pred_region
      %39 = dma.done [#allocation6], 64
    $region17: #{tpu_custom_call.1} parent=1 // pred_fallthru
      _
    %p41 = scmp.eq.s32.totalorder 0, 0
    // Predicated region
    $region18: #{tpu_custom_call.1} parent=1 // pred_check
      %p42 = pneg %p41
    $region19: #{tpu_custom_call.1} parent=1 // pred_check_branch
      %44 = sbr.rel (%p42) target = $region21
    $region20: #{tpu_custom_call.1} parent=1 // pred_region
      %45 = vst [vmem:[#allocation7] sm:$0xff] 0.0
    $region21: #{tpu_custom_call.1} parent=1 // pred_fallthru
      _
    %v46 = vld [vmem:[#allocation2] sm:$0xf]
    %v47 = vld [vmem:[#allocation5] sm:$0xf]
    %48 = vxpose.xlu0.c.b16.start [1/8] %v46, 128
    %49 = vxpose.xlu0.c.b16.cont [2/8] 0, 128
    %50 = vxpose.xlu0.c.b16.cont [3/8] 0, 128
    %51 = vxpose.xlu0.c.b16.cont [4/8] 0, 128
    %52 = vxpose.xlu0.c.b16.cont [5/8] 0, 128
    %53 = vxpose.xlu0.c.b16.cont [6/8] 0, 128
    %54 = vxpose.xlu0.c.b16.cont [7/8] 0, 128
    %55 = vxpose.xlu0.c.b16.end [8/8] 0, 128
    %v56 = vpop.trf.xlu0
    %v57 = vpop.trf.xlu0
    %v58 = vpop.trf.xlu0
    %v59 = vpop.trf.xlu0
    %v60 = vpop.trf.xlu0
    %v61 = vpop.trf.xlu0
    %v62 = vpop.trf.xlu0
    %v63 = vpop.trf.xlu0
    %vm64 = vcmask 64512
    %v66 = vsel %vm64, %v56, 0
    %v69 = vsel %vm64, %v57, 0
    %v72 = vsel %vm64, %v58, 0
    %v75 = vsel %vm64, %v59, 0
    %v78 = vsel %vm64, %v60, 0
    %v81 = vsel %vm64, %v61, 0
    %v84 = vsel %vm64, %v62, 0
    %v87 = vsel %vm64, %v63, 0
    %vm89 = vcmask 1043456
    %v91 = vsel %vm89, %v47, 0
    %93 = vmatpush.bf16.msra.mxu0 0
    %94 = vmatpush.bf16.msra.mxu0 0
    %95 = vmatpush.bf16.msra.mxu0 0
    %96 = vmatpush.bf16.msra.mxu0 0
    %97 = vmatpush.bf16.msra.mxu0 0
    %98 = vmatpush.bf16.msra.mxu0 0
    %99 = vmatpush.bf16.msra.mxu0 0
    %100 = vmatpush.bf16.msra.mxu0 %v91
    %101 = vmatmul.bf16.gmra.mxu0 %v66
    %v102 = vpop.f32.mrf.mxu0
    %v103 = vadd.f32 0.0, %v102
    %v104 = vpop.f32.mrf.mxu0
    %v105 = vadd.f32 0.0, %v104
    %106 = vmatmul.bf16.gmra.mxu0 %v69
    %v107 = vpop.f32.mrf.mxu0
    %v108 = vadd.f32 0.0, %v107
    %v109 = vpop.f32.mrf.mxu0
    %v110 = vadd.f32 0.0, %v109
    %111 = vmatmul.bf16.gmra.mxu0 %v72
    %v112 = vpop.f32.mrf.mxu0
    %v113 = vadd.f32 0.0, %v112
    %v114 = vpop.f32.mrf.mxu0
    %v115 = vadd.f32 0.0, %v114
    %116 = vmatmul.bf16.gmra.mxu0 %v75
    %v117 = vpop.f32.mrf.mxu0
    %v118 = vadd.f32 0.0, %v117
    %v119 = vpop.f32.mrf.mxu0
    %v120 = vadd.f32 0.0, %v119
    %121 = vmatmul.bf16.gmra.mxu0 %v78
    %v122 = vpop.f32.mrf.mxu0
    %v123 = vadd.f32 0.0, %v122
    %v124 = vpop.f32.mrf.mxu0
    %v125 = vadd.f32 0.0, %v124
    %126 = vmatmul.bf16.gmra.mxu0 %v81
    %v127 = vpop.f32.mrf.mxu0
    %v128 = vadd.f32 0.0, %v127
    %v129 = vpop.f32.mrf.mxu0
    %v130 = vadd.f32 0.0, %v129
    %131 = vmatmul.bf16.gmra.mxu0 %v84
    %v132 = vpop.f32.mrf.mxu0
    %v133 = vadd.f32 0.0, %v132
    %v134 = vpop.f32.mrf.mxu0
    %v135 = vadd.f32 0.0, %v134
    %136 = vmatmul.bf16.gmra.mxu0 %v87
    %v137 = vpop.f32.mrf.mxu0
    %v138 = vadd.f32 0.0, %v137
    %v139 = vpop.f32.mrf.mxu0
    %v140 = vadd.f32 0.0, %v139
    %141 = vdwg.mxu0
    %v142 = vmul.f32 %v103, %v103
    %v143 = vmul.f32 %v105, %v105
    %v144 = vmul.f32 %v108, %v108
    %v145 = vmul.f32 %v110, %v110
    %v146 = vmul.f32 %v113, %v113
    %v147 = vmul.f32 %v115, %v115
    %v148 = vmul.f32 %v118, %v118
    %v149 = vmul.f32 %v120, %v120
    %v150 = vmul.f32 %v123, %v123
    %v151 = vmul.f32 %v125, %v125
    %v152 = vmul.f32 %v128, %v128
    %v153 = vmul.f32 %v130, %v130
    %v154 = vmul.f32 %v133, %v133
    %v155 = vmul.f32 %v135, %v135
    %v156 = vmul.f32 %v138, %v138
    %v157 = vmul.f32 %v140, %v140
    %v158 = vadd.f32 %v142, %v143
    %v159 = vadd.f32 %v158, %v144
    %v160 = vadd.f32 %v159, %v145
    %v161 = vadd.f32 %v160, %v146
    %v162 = vadd.f32 %v161, %v147
    %v163 = vadd.f32 %v162, %v148
    %v164 = vadd.f32 %v163, %v149
    %v165 = vadd.f32 %v164, %v150
    %v166 = vadd.f32 %v165, %v151
    %v167 = vadd.f32 %v166, %v152
    %v168 = vadd.f32 %v167, %v153
    %v169 = vadd.f32 %v168, %v154
    %v170 = vadd.f32 %v169, %v155
    %v171 = vadd.f32 %v170, %v156
    %v172 = vadd.f32 %v171, %v157
    %173 = vadd.xlane.f32.xlu0 %v172
    %v174 = vpop.xlane.xlu0 %173
    %v175 = vrot.slane %v174, 4
    %v176 = vadd.f32 %v174, %v175
    %v177 = vrot.slane %v176, 2
    %v178 = vadd.f32 %v176, %v177
    %v179 = vrot.slane %v178, 1
    %v180 = vadd.f32 %v178, %v179
    %s181 = vtos %v180
    %p182 = sweird.f32 %s181
    %p183 = pneg %p182
    %s184 = scalar_select %p182, 0.0, %s181
    %s185 = scalar_select %p182, 1.0, 0.0
    %v186 = vlaneseq
    %v187 = vshrl.u32 %v186, 7
    %vm188 = vcmp.eq.s32.totalorder %v187, 0
    %v189 = vstv %s184
    %v190 = vsel %vm188, %v189, 0.0
    %vm191 = vcmp.eq.s32.totalorder %v187, 3
    %v192 = vstv %s185
    %v193 = vsel %vm191, %v192, 0.0
    %v194 = vadd.f32 %v190, %v193
    %v195 = vld [vmem:[#allocation7] sm:$0xff]
    %v196 = vadd.f32 %v195, %v194
    %197 = vst [vmem:[#allocation7] sm:$0xff] %v196
    %p198 = scmp.eq.s32.totalorder 0, 0
    %p199 = pnand %p198, %p183
    %p200 = pneg %p199
    // Predicated region
    $region22: #{tpu_custom_call.1} parent=1 // pred_check
      _
    $region23: #{tpu_custom_call.1} parent=1 // pred_check_branch
      %202 = sbr.rel (%p199) target = $region25
    $region24: #{tpu_custom_call.1} parent=1 // pred_region
      %v203 = vadd.s32 %v187, 8
      %v204 = vadd.s32 %v187, 16
      %v205 = vadd.s32 %v187, 24
      %v206 = vadd.s32 %v187, 32
      %v207 = vadd.s32 %v187, 40
      %v208 = vadd.s32 %v187, 48
      %v209 = vadd.s32 %v187, 56
      %v210 = vadd.s32 %v187, 64
      %v211 = vadd.s32 %v187, 72
      %v212 = vadd.s32 %v187, 80
      %v213 = vadd.s32 %v187, 88
      %v214 = vadd.s32 %v187, 96
      %v215 = vadd.s32 %v187, 104
      %v216 = vadd.s32 %v187, 112
      %v217 = vadd.s32 %v187, 120
      %v218 = vlaneseq
      %v219 = vand.u32 %v218, 127
      %s220 = smul.u32 0, 128
      %v221 = vstv %s220
      %v222 = vadd.s32 %v221, %v219
      %vm223 = vcmp.lt.s32.totalorder %v222, 32
      %vm224 = vcmp.eq.s32.totalorder %v187, %v219
      %vm225 = vcmp.eq.s32.totalorder %v203, %v219
      %vm226 = vcmp.eq.s32.totalorder %v204, %v219
      %vm227 = vcmp.eq.s32.totalorder %v205, %v219
      %vm228 = vcmp.eq.s32.totalorder %v206, %v219
      %vm229 = vcmp.eq.s32.totalorder %v207, %v219
      %vm230 = vcmp.eq.s32.totalorder %v208, %v219
      %vm231 = vcmp.eq.s32.totalorder %v209, %v219
      %vm232 = vcmp.eq.s32.totalorder %v210, %v219
      %vm233 = vcmp.eq.s32.totalorder %v211, %v219
      %vm234 = vcmp.eq.s32.totalorder %v212, %v219
      %vm235 = vcmp.eq.s32.totalorder %v213, %v219
      %vm236 = vcmp.eq.s32.totalorder %v214, %v219
      %vm237 = vcmp.eq.s32.totalorder %v215, %v219
      %vm238 = vcmp.eq.s32.totalorder %v216, %v219
      %vm239 = vcmp.eq.s32.totalorder %v217, %v219
      %vm240 = vmand %vm224, %vm223
      %vm241 = vmand %vm225, %vm223
      %vm242 = vmand %vm226, %vm223
      %vm243 = vmand %vm227, %vm223
      %vm244 = vmand %vm228, %vm223
      %vm245 = vmand %vm229, %vm223
      %vm246 = vmand %vm230, %vm223
      %vm247 = vmand %vm231, %vm223
      %vm248 = vmand %vm232, %vm223
      %vm249 = vmand %vm233, %vm223
      %vm250 = vmand %vm234, %vm223
      %vm251 = vmand %vm235, %vm223
      %vm252 = vmand %vm236, %vm223
      %vm253 = vmand %vm237, %vm223
      %vm254 = vmand %vm238, %vm223
      %vm255 = vmand %vm239, %vm223
      %v256 = vsel %vm240, %v142, 0.0
      %v257 = vsel %vm241, %v143, 0.0
      %v258 = vsel %vm242, %v144, 0.0
      %v259 = vsel %vm243, %v145, 0.0
      %v260 = vsel %vm244, %v146, 0.0
      %v261 = vsel %vm245, %v147, 0.0
      %v262 = vsel %vm246, %v148, 0.0
      %v263 = vsel %vm247, %v149, 0.0
      %v264 = vsel %vm248, %v150, 0.0
      %v265 = vsel %vm249, %v151, 0.0
      %v266 = vsel %vm250, %v152, 0.0
      %v267 = vsel %vm251, %v153, 0.0
      %v268 = vsel %vm252, %v154, 0.0
      %v269 = vsel %vm253, %v155, 0.0
      %v270 = vsel %vm254, %v156, 0.0
      %v271 = vsel %vm255, %v157, 0.0
      %v272 = vadd.f32 %v256, %v257
      %v273 = vadd.f32 %v272, %v258
      %v274 = vadd.f32 %v273, %v259
      %v275 = vadd.f32 %v274, %v260
      %v276 = vadd.f32 %v275, %v261
      %v277 = vadd.f32 %v276, %v262
      %v278 = vadd.f32 %v277, %v263
      %v279 = vadd.f32 %v278, %v264
      %v280 = vadd.f32 %v279, %v265
      %v281 = vadd.f32 %v280, %v266
      %v282 = vadd.f32 %v281, %v267
      %v283 = vadd.f32 %v282, %v268
      %v284 = vadd.f32 %v283, %v269
      %v285 = vadd.f32 %v284, %v270
      %v286 = vadd.f32 %v285, %v271
      %287 = vadd.xlane.f32.xlu0 %v286
      %v288 = vpop.xlane.xlu0 %287
      %v289 = vrot.slane %v288, 4
      %v290 = vadd.f32 %v288, %v289
      %v291 = vrot.slane %v290, 2
      %v292 = vadd.f32 %v290, %v291
      %v293 = vrot.slane %v292, 1
      %v294 = vadd.f32 %v292, %v293
      %s295 = vtos %v294
      %v296 = vmul.f32 %v103, 0.125
      %v297 = vmul.f32 %v105, 0.125
      %v298 = vmul.f32 %v108, 0.125
      %v299 = vmul.f32 %v110, 0.125
      %v300 = vmul.f32 %v113, 0.125
      %v301 = vmul.f32 %v115, 0.125
      %v302 = vmul.f32 %v118, 0.125
      %v303 = vmul.f32 %v120, 0.125
      %v304 = vmul.f32 %v123, 0.125
      %v305 = vmul.f32 %v125, 0.125
      %v306 = vmul.f32 %v128, 0.125
      %v307 = vmul.f32 %v130, 0.125
      %v308 = vmul.f32 %v133, 0.125
      %v309 = vmul.f32 %v135, 0.125
      %v310 = vmul.f32 %v138, 0.125
      %v311 = vmul.f32 %v140, 0.125
      %v312 = vsub.f32 %v296, 1.0
      %v313 = vsub.f32 %v297, 1.0
      %v314 = vsub.f32 %v298, 1.0
      %v315 = vsub.f32 %v299, 1.0
      %v316 = vsub.f32 %v300, 1.0
      %v317 = vsub.f32 %v301, 1.0
      %v318 = vsub.f32 %v302, 1.0
      %v319 = vsub.f32 %v303, 1.0
      %v320 = vsub.f32 %v304, 1.0
      %v321 = vsub.f32 %v305, 1.0
      %v322 = vsub.f32 %v306, 1.0
      %v323 = vsub.f32 %v307, 1.0
      %v324 = vsub.f32 %v308, 1.0
      %v325 = vsub.f32 %v309, 1.0
      %v326 = vsub.f32 %v310, 1.0
      %v327 = vsub.f32 %v311, 1.0
      %v328 = vmul.f32 %v312, %v312
      %v329 = vmul.f32 %v313, %v313
      %v330 = vmul.f32 %v314, %v314
      %v331 = vmul.f32 %v315, %v315
      %v332 = vmul.f32 %v316, %v316
      %v333 = vmul.f32 %v317, %v317
      %v334 = vmul.f32 %v318, %v318
      %v335 = vmul.f32 %v319, %v319
      %v336 = vmul.f32 %v320, %v320
      %v337 = vmul.f32 %v321, %v321
      %v338 = vmul.f32 %v322, %v322
      %v339 = vmul.f32 %v323, %v323
      %v340 = vmul.f32 %v324, %v324
      %v341 = vmul.f32 %v325, %v325
      %v342 = vmul.f32 %v326, %v326
      %v343 = vmul.f32 %v327, %v327
      %v344 = vsel %vm240, %v328, 0.0
      %v345 = vsel %vm241, %v329, 0.0
      %v346 = vsel %vm242, %v330, 0.0
      %v347 = vsel %vm243, %v331, 0.0
      %v348 = vsel %vm244, %v332, 0.0
      %v349 = vsel %vm245, %v333, 0.0
      %v350 = vsel %vm246, %v334, 0.0
      %v351 = vsel %vm247, %v335, 0.0
      %v352 = vsel %vm248, %v336, 0.0
      %v353 = vsel %vm249, %v337, 0.0
      %v354 = vsel %vm250, %v338, 0.0
      %v355 = vsel %vm251, %v339, 0.0
      %v356 = vsel %vm252, %v340, 0.0
      %v357 = vsel %vm253, %v341, 0.0
      %v358 = vsel %vm254, %v342, 0.0
      %v359 = vsel %vm255, %v343, 0.0
      %v360 = vadd.f32 %v344, %v345
      %v361 = vadd.f32 %v360, %v346
      %v362 = vadd.f32 %v361, %v347
      %v363 = vadd.f32 %v362, %v348
      %v364 = vadd.f32 %v363, %v349
      %v365 = vadd.f32 %v364, %v350
      %v366 = vadd.f32 %v365, %v351
      %v367 = vadd.f32 %v366, %v352
      %v368 = vadd.f32 %v367, %v353
      %v369 = vadd.f32 %v368, %v354
      %v370 = vadd.f32 %v369, %v355
      %v371 = vadd.f32 %v370, %v356
      %v372 = vadd.f32 %v371, %v357
      %v373 = vadd.f32 %v372, %v358
      %v374 = vadd.f32 %v373, %v359
      %375 = vadd.xlane.f32.xlu0 %v374
      %v376 = vpop.xlane.xlu0 %375
      %v377 = vrot.slane %v376, 4
      %v378 = vadd.f32 %v376, %v377
      %v379 = vrot.slane %v378, 2
      %v380 = vadd.f32 %v378, %v379
      %v381 = vrot.slane %v380, 1
      %v382 = vadd.f32 %v380, %v381
      %s383 = vtos %v382
      %vm384 = vcmp.eq.s32.totalorder %v187, 1
      %v385 = vstv %s295
      %v386 = vsel %vm384, %v385, 0.0
      %vm387 = vcmp.eq.s32.totalorder %v187, 2
      %v388 = vstv %s383
      %v389 = vsel %vm387, %v388, 0.0
      %v390 = vadd.f32 %v386, %v389
      %v391 = vld [vmem:[#allocation7] sm:$0xff]
      %v392 = vadd.f32 %v391, %v390
      %393 = vst [vmem:[#allocation7] sm:$0xff] %v392
    $region25: #{tpu_custom_call.1} parent=1 // pred_fallthru
      _
    // Predicated region
    $region26: #{tpu_custom_call.1} parent=1 // pred_check
      _
    $region27: #{tpu_custom_call.1} parent=1 // pred_check_branch
      %395 = sbr.rel (0) target = $region29
    $region28: #{tpu_custom_call.1} parent=1 // pred_region
      %397 = vsyncadd [#allocation4], 0
      %s399 = sshll.u32 [#allocation7], 4
      %s400 = int_to_ptr.vmem [resolvable:$true] %s399
      %s401 = sshll.u32 %s2, 4
      %s402 = int_to_ptr.hbm [resolvable:$true] %s401
      %404 = dma.vmem_to_hbm [thread:$0]  %s400, 128, %s402, [#allocation4]
    $region29: #{tpu_custom_call.1} parent=1 // pred_fallthru
      _
    // Predicated region
    $region30: #{tpu_custom_call.1} parent=1 // pred_check
      _
    $region31: #{tpu_custom_call.1} parent=1 // pred_check_branch
      %406 = sbr.rel (0) target = $region33
    $region32: #{tpu_custom_call.1} parent=1 // pred_region
      %408 = dma.done [#allocation4], 128
    $region33: #{tpu_custom_call.1} parent=1 // pred_fallthru
      _
    %409 = vsyncpa [#allocation3], 1
    %410 = vsyncpa [#allocation6], 1
    %411 = vsyncpa [#allocation4], 1

</llo_original>
